<compile_context>
chip_gen: v6e
topology: v6e:2x2x1
jax: 0.10.0
libtpu: 0.0.40
codegen_flags: <defaults>
</compile_context>

<pallas_src>
import jax
import jax.numpy as jnp
from jax.experimental import pallas as pl
from jax.experimental.pallas import tpu as pltpu

HIDDEN = 30        # hidden width fixed by the PyTorch module
H_PAD = 128        # hidden padded to full lane width (lane-dense intermediate)
O_PAD = 128        # output padded to full lane width (unmasked stores)
B_TILE_MAX = 1024  # safe on v7x (64 MiB VMEM) and big enough for v5e/v6e


def _round_up(x, m):
    return ((x + m - 1) // m) * m


def _make_actor_kernel(s_pad):
    """Kernel closing over the static row offsets inside the packed param buffer."""
    w2_off = s_pad
    b1_row = s_pad + H_PAD
    b2_row = b1_row + 1
    bd_row = b2_row + 1

    def kernel(s_ref, p_ref, out_ref):
        # Static .at[]-style views into the single packed parameter block.
        w1 = p_ref[:s_pad, :]                    # (S_PAD, 128)  zero-padded cols >= 30
        w2 = p_ref[w2_off:w2_off + H_PAD, :]     # (128, 128)    zero rows >= 30, cols >= A
        b1 = p_ref[b1_row:b1_row + 1, :]         # (1, 128)
        b2 = p_ref[b2_row:b2_row + 1, :]         # (1, 128)
        bound = p_ref[bd_row:bd_row + 1, :]      # (1, 128)

        # Hidden layer: (B_TILE, S_PAD) @ (S_PAD, 128) on the MXU, f32 accumulate.
        h = jnp.dot(s_ref[...], w1, preferred_element_type=jnp.float32)
        h = jnp.maximum(h + b1, 0.0)
        # Output layer: (B_TILE, 128) @ (128, 128); padded rows/cols are zero so
        # the logical math is identical to the unpadded Linear layers.
        a = jnp.dot(h, w2, preferred_element_type=jnp.float32)
        a = jnp.tanh(a + b2)
        out_ref[...] = (a * bound).astype(out_ref.dtype)   # lane-dense store

    return kernel


def actor_forward(s, w1, b1, w2, b2, action_bound):
    """s: (B, state_dim); w1: (state_dim, 30); b1: (1, 30);
    w2: (30, action_dim); b2: (1, action_dim); action_bound: (1, action_dim).
    Returns (B, action_dim) float32."""
    B, state_dim = s.shape
    action_dim = w2.shape[1]

    S_PAD = _round_up(max(state_dim, 8), 8)
    R_PAD = _round_up(S_PAD + H_PAD + 3, 8)

    # ---- pack all parameters into one zero-padded (R_PAD, 128) buffer ----------
    p = jnp.zeros((R_PAD, 128), jnp.float32)
    p = p.at[:state_dim, :HIDDEN].set(w1.astype(jnp.float32))
    p = p.at[S_PAD:S_PAD + HIDDEN, :action_dim].set(w2.astype(jnp.float32))
    p = p.at[S_PAD + H_PAD, :HIDDEN].set(b1.reshape(-1).astype(jnp.float32))
    p = p.at[S_PAD + H_PAD + 1, :action_dim].set(b2.reshape(-1).astype(jnp.float32))
    p = p.at[S_PAD + H_PAD + 2, :action_dim].set(
        jnp.asarray(action_bound, jnp.float32).reshape(-1))

    # ---- pad the batch / feature dims so every block is (8,128)-friendly -------
    if B > B_TILE_MAX:
        B_TILE = B_TILE_MAX
        B_pad = _round_up(B, B_TILE)
    else:
        B_pad = _round_up(max(B, 8), 8)
        B_TILE = B_pad
    s_p = jnp.zeros((B_pad, S_PAD), jnp.float32)
    s_p = s_p.at[:B, :state_dim].set(s.astype(jnp.float32))

    grid = (B_pad // B_TILE,)
    kernel = _make_actor_kernel(S_PAD)

    out_p = pl.pallas_call(
        kernel,
        out_shape=jax.ShapeDtypeStruct((B_pad, O_PAD), jnp.float32),
        grid_spec=pltpu.PrefetchScalarGridSpec(
            num_scalar_prefetch=0,
            grid=grid,
            in_specs=[
                # Batch-tiled activations: double-buffered DMA overlaps compute.
                pl.BlockSpec((B_TILE, S_PAD), lambda i: (i, 0)),
                # Single packed parameter block, resident across all grid steps.
                pl.BlockSpec((R_PAD, 128), lambda i: (0, 0)),
            ],
            out_specs=pl.BlockSpec((B_TILE, O_PAD), lambda i: (i, 0)),
        ),
        compiler_params=pltpu.CompilerParams(
            dimension_semantics=("parallel",),      # shard batch axis across v7x TCs
            vmem_limit_bytes=32 * 1024 * 1024,      # explicit; well above actual use
        ),
    )(s_p, p)

    # Slice back to the logical (B, action_dim) result.
    return out_p[:B, :action_dim]


def init_actor_params(key, state_dim, action_dim, action_bound):
    """Deterministic synthetic init mirroring the PyTorch __init__:
    weights ~ N(0, 0.3), biases = 0.1."""
    k1, k2 = jax.random.split(key, 2)
    # Stored as (in, out) == transpose of torch's (out, in); distribution is the same.
    w1 = 0.3 * jax.random.normal(k1, (state_dim, 30), dtype=jnp.float32)
    b1 = jnp.full((1, 30), 0.1, dtype=jnp.float32)
    w2 = 0.3 * jax.random.normal(k2, (30, action_dim), dtype=jnp.float32)
    b2 = jnp.full((1, action_dim), 0.1, dtype=jnp.float32)
    bound = jnp.asarray(action_bound, dtype=jnp.float32).reshape(1, action_dim)
    return w1, b1, w2, b2, bound


if __name__ == "__main__":
    key = jax.random.PRNGKey(0)
    k_params, k_state = jax.random.split(key)

    batch = 2
    state_dim = 8
    action_dim = 4
    action_bound = [2.0, 1.0, 0.5, 3.0]

    w1, b1, w2, b2, bound = init_actor_params(k_params, state_dim, action_dim, action_bound)
    s = jax.random.normal(k_state, (batch, state_dim), dtype=jnp.float32)

    out = actor_forward(s, w1, b1, w2, b2, bound)
    out = jax.block_until_ready(out)

    # Pure-JAX reference check (same math, outside Pallas)
    ref = jnp.tanh(jnp.maximum(s @ w1 + b1, 0.0) @ w2 + b2) * bound
    assert out.shape == (batch, action_dim)
    assert jnp.allclose(out, ref, atol=1e-5, rtol=1e-5)

    print("KERNEL_OK")
</pallas_src>

<mosaic_0001>
module attributes {stable_mosaic.version = 11 : i64} {
  func.func @kernel(%arg0: i32, %arg1: memref<8x8xf32, #tpu.memory_space<vmem>>, %arg2: memref<144x128xf32, #tpu.memory_space<vmem>>, %arg3: memref<8x128xf32, #tpu.memory_space<vmem>>) attributes {dimension_semantics = [#tpu.dimension_semantics<parallel>], iteration_bounds = array<i64: 1>, scalar_prefetch = 0 : i64, scratch_operands = 0 : i64, tpu.core_type = #tpu.core_type<tc>, window_params = [{transform_indices = @transform_0, window_bounds = array<i64: 8, 8>}, {pipeline_mode = #tpu.pipeline_mode<synchronous>, transform_indices = @transform_1, window_bounds = array<i64: 144, 128>}, {transform_indices = @transform_2, window_bounds = array<i64: 8, 128>}]} {
    %c0 = arith.constant 0 : index
    %c0_0 = arith.constant 0 : index
    %0 = vector.load %arg2[%c0, %c0_0] : memref<144x128xf32, #tpu.memory_space<vmem>>, vector<8x128xf32>
    %c8 = arith.constant 8 : index
    %c0_1 = arith.constant 0 : index
    %1 = vector.load %arg2[%c8, %c0_1] : memref<144x128xf32, #tpu.memory_space<vmem>>, vector<128x128xf32>
    %c136 = arith.constant 136 : index
    %c0_2 = arith.constant 0 : index
    %2 = vector.load %arg2[%c136, %c0_2] : memref<144x128xf32, #tpu.memory_space<vmem>>, vector<1x128xf32>
    %c137 = arith.constant 137 : index
    %c0_3 = arith.constant 0 : index
    %3 = vector.load %arg2[%c137, %c0_3] : memref<144x128xf32, #tpu.memory_space<vmem>>, vector<1x128xf32>
    %c138 = arith.constant 138 : index
    %c0_4 = arith.constant 0 : index
    %4 = vector.load %arg2[%c138, %c0_4] : memref<144x128xf32, #tpu.memory_space<vmem>>, vector<1x128xf32>
    %c0_5 = arith.constant 0 : index
    %c0_6 = arith.constant 0 : index
    %5 = vector.load %arg1[%c0_5, %c0_6] : memref<8x8xf32, #tpu.memory_space<vmem>>, vector<8x8xf32>
    %cst = arith.constant dense<0.000000e+00> : vector<8x128xf32>
    %6 = tpu.matmul %5, %0, %cst {dimension_numbers = #tpu.dot_dimension_numbers<[1], [0], [0], [1], [0, 0, 1, 1], [], []>} : vector<8x8xf32>, vector<8x128xf32>, vector<8x128xf32> -> vector<8x128xf32>
    %7 = vector.broadcast %2 : vector<1x128xf32> to vector<8x128xf32>
    %8 = arith.addf %6, %7 : vector<8x128xf32>
    %cst_7 = arith.constant 0.000000e+00 : f32
    %9 = vector.broadcast %cst_7 : f32 to vector<8x128xf32>
    %10 = arith.maximumf %8, %9 : vector<8x128xf32>
    %cst_8 = arith.constant dense<0.000000e+00> : vector<8x128xf32>
    %11 = tpu.matmul %10, %1, %cst_8 {dimension_numbers = #tpu.dot_dimension_numbers<[1], [0], [0], [1], [0, 0, 1, 1], [], []>} : vector<8x128xf32>, vector<128x128xf32>, vector<8x128xf32> -> vector<8x128xf32>
    %12 = vector.broadcast %3 : vector<1x128xf32> to vector<8x128xf32>
    %13 = arith.addf %11, %12 : vector<8x128xf32>
    %14 = math.tanh %13 : vector<8x128xf32>
    %15 = vector.broadcast %4 : vector<1x128xf32> to vector<8x128xf32>
    %16 = arith.mulf %14, %15 : vector<8x128xf32>
    %c0_9 = arith.constant 0 : index
    %c0_10 = arith.constant 0 : index
    %17 = vector.load %arg3[%c0_9, %c0_10] : memref<8x128xf32, #tpu.memory_space<vmem>>, vector<8x128xf32>
    tpu.vector_store %arg3[%c0_9, %c0_10], %16 {strides = array<i32>} : memref<8x128xf32, #tpu.memory_space<vmem>>, vector<8x128xf32>,
    return
  }
  func.func @transform_0(%arg0: i32) -> (i32, i32) {
    %c0_i32 = arith.constant 0 : i32
    %c0_i32_0 = arith.constant 0 : i32
    return %arg0, %c0_i32 : i32, i32
  }
  func.func @transform_1(%arg0: i32) -> (i32, i32) {
    %c0_i32 = arith.constant 0 : i32
    %c0_i32_0 = arith.constant 0 : i32
    %c0_i32_1 = arith.constant 0 : i32
    return %c0_i32, %c0_i32_0 : i32, i32
  }
  func.func @transform_2(%arg0: i32) -> (i32, i32) {
    %c0_i32 = arith.constant 0 : i32
    %c0_i32_0 = arith.constant 0 : i32
    return %arg0, %c0_i32 : i32, i32
  }
}

</mosaic_0001>

<llo_original>
// kernel: tpu_custom_call.1
$region0: #{tpu_custom_call.1}
  #allocation0 [shape = 'u32[]', space=smem, size = 0x4, offset = 0x4, fixed_abs, tag = 'smem constant byte address 0x4 - core index']
  #allocation1 [shape = 'u32[144,128]{1,0:T(1,128)}', space=vmem, size = 0x12000, scoped, tag = 'internal scratch']
  %s0 = inlined_call_operand.hbm [shape: f32[8,8], index: 0, kind: input, shape index: {}]
  %s1 = inlined_call_operand.hbm [shape: f32[144,128], index: 1, kind: input, shape index: {}]
  %s2 = inlined_call_operand.hbm [shape: f32[8,128], index: 2, kind: output, shape index: {}]
  %s3 = sld [smem:[#allocation0]]
  $region26: #{tpu_custom_call.1} parent=0
    _
  %s5 = ssub.s32 1, %s3
  %s6 = scalar_select 0, %s5, %s3
  $region1: #{tpu_custom_call.1} parent=0
    #allocation2 [shape = 'u8[4096]{0}', space=vmem, size = 0x1000, scoped, tag = 'input window, operand 0, single buffered']
    #allocation3 [shape = 's32[1]{0}', space=sflag, size = 0x4, scoped, tag = 'scoped memory for tpu_custom_call.1']
    #allocation4 [shape = 's32[1]{0}', space=sflag, size = 0x4, scoped, tag = 'scoped memory for tpu_custom_call.1']
    #allocation5 [shape = 'u8[73728]{0}', space=vmem, size = 0x12000, scoped, tag = 'input window, operand 1, single buffered']
    #allocation6 [shape = 's32[1]{0}', space=sflag, size = 0x4, scoped, tag = 'scoped memory for tpu_custom_call.1']
    #allocation7 [shape = 'u8[4096]{0}', space=vmem, size = 0x1000, scoped, tag = 'output window, operand 0, single buffered']
    %7 = vsyncpa [#allocation3], 0
    %8 = vsyncpa [#allocation6], 0
    %9 = vsyncpa [#allocation4], 0
    // Predicated region
    $region2: #{tpu_custom_call.1} parent=1 // pred_check
      _
    $region3: #{tpu_custom_call.1} parent=1 // pred_check_branch
      %11 = sbr.rel (0) target = $region5
    $region4: #{tpu_custom_call.1} parent=1 // pred_region
      %s13 = ssub.s32 128, 128
      %14 = vsyncadd [#allocation3], %s13
      %s16 = sshll.u32 [#allocation2], 4
      %s17 = int_to_ptr.vmem [resolvable:$true] %s16
      %19 = dma.hbm_to_vmem [thread:$0]  %s0, 128, %s17, [#allocation3]
    $region5: #{tpu_custom_call.1} parent=1 // pred_fallthru
      _
    // Predicated region
    $region6: #{tpu_custom_call.1} parent=1 // pred_check
      _
    $region7: #{tpu_custom_call.1} parent=1 // pred_check_branch
      %21 = sbr.rel (0) target = $region9
    $region8: #{tpu_custom_call.1} parent=1 // pred_region
      %s23 = ssub.s32 2304, 2304
      %24 = vsyncadd [#allocation6], %s23
      %s25 = sshll.u32 [#allocation5], 4
      %s26 = int_to_ptr.vmem [resolvable:$true] %s25
      %31 = dma.hbm_to_vmem [thread:$0]  %s1, 2304, %s26, [#allocation6], 128, 128, 8
    $region9: #{tpu_custom_call.1} parent=1 // pred_fallthru
      _
    // Predicated region
    $region10: #{tpu_custom_call.1} parent=1 // pred_check
      _
    $region11: #{tpu_custom_call.1} parent=1 // pred_check_branch
      %33 = sbr.rel (0) target = $region13
    $region12: #{tpu_custom_call.1} parent=1 // pred_region
      %34 = dma.done [#allocation3], 128
    $region13: #{tpu_custom_call.1} parent=1 // pred_fallthru
      _
    // Predicated region
    $region14: #{tpu_custom_call.1} parent=1 // pred_check
      _
    $region15: #{tpu_custom_call.1} parent=1 // pred_check_branch
      %36 = sbr.rel (0) target = $region17
    $region16: #{tpu_custom_call.1} parent=1 // pred_region
      %37 = dma.done [#allocation6], 2304
    $region17: #{tpu_custom_call.1} parent=1 // pred_fallthru
      _
    %v38 = vld [vmem:[#allocation5] sm:$0xff]
    %v39 = vld [vmem:[#allocation5 + $0x8] sm:$0xff]
    %v40 = vld [vmem:[#allocation5 + $0x10] sm:$0xff]
    %v41 = vld [vmem:[#allocation5 + $0x18] sm:$0xff]
    %v42 = vld [vmem:[#allocation5 + $0x20] sm:$0xff]
    %v43 = vld [vmem:[#allocation5 + $0x28] sm:$0xff]
    %v44 = vld [vmem:[#allocation5 + $0x30] sm:$0xff]
    %v45 = vld [vmem:[#allocation5 + $0x38] sm:$0xff]
    %v46 = vld [vmem:[#allocation5 + $0x40] sm:$0xff]
    %v47 = vld [vmem:[#allocation5 + $0x48] sm:$0xff]
    %v48 = vld [vmem:[#allocation5 + $0x50] sm:$0xff]
    %v49 = vld [vmem:[#allocation5 + $0x58] sm:$0xff]
    %v50 = vld [vmem:[#allocation5 + $0x60] sm:$0xff]
    %v51 = vld [vmem:[#allocation5 + $0x68] sm:$0xff]
    %v52 = vld [vmem:[#allocation5 + $0x70] sm:$0xff]
    %v53 = vld [vmem:[#allocation5 + $0x78] sm:$0xff]
    %v54 = vld [vmem:[#allocation5 + $0x80] sm:$0xff]
    %v55 = vld [vmem:[#allocation5 + $0x88] sm:$0x1]
    %v56 = vld [vmem:[#allocation5 + $0x89] sm:$0x1]
    %v57 = vld [vmem:[#allocation5 + $0x8a] sm:$0x1]
    %v58 = vld [vmem:[#allocation2] sm:$0xff]
    %v59 = vlaneseq
    %v60 = vshrl.u32 %v59, 7
    %v61 = vsub.s32 0, %v60
    %v62 = vrot.slane %v55, %v61
    %vm63 = vcmask 64512
    %v65 = vsel %vm63, %v58, 0
    %67 = vmatprep.subr.mxu0 0.0
    %68 = vmatpush1.msra.mxu0 0.0
    %69 = vmatprep.subr.mxu0 0.0
    %70 = vmatpush1.msra.mxu0 0.0
    %71 = vmatprep.subr.mxu0 0.0
    %72 = vmatpush1.msra.mxu0 0.0
    %73 = vmatprep.subr.mxu0 0.0
    %74 = vmatpush1.msra.mxu0 0.0
    %75 = vmatprep.subr.mxu0 0.0
    %76 = vmatpush1.msra.mxu0 0.0
    %77 = vmatprep.subr.mxu0 0.0
    %78 = vmatpush1.msra.mxu0 0.0
    %79 = vmatprep.subr.mxu0 0.0
    %80 = vmatpush1.msra.mxu0 0.0
    %81 = vmatprep.subr.mxu0 0.0
    %82 = vmatpush1.msra.mxu0 0.0
    %83 = vmatprep.subr.mxu0 0.0
    %84 = vmatpush1.msra.mxu0 0.0
    %85 = vmatprep.subr.mxu0 0.0
    %86 = vmatpush1.msra.mxu0 0.0
    %87 = vmatprep.subr.mxu0 0.0
    %88 = vmatpush1.msra.mxu0 0.0
    %89 = vmatprep.subr.mxu0 0.0
    %90 = vmatpush1.msra.mxu0 0.0
    %91 = vmatprep.subr.mxu0 0.0
    %92 = vmatpush1.msra.mxu0 0.0
    %93 = vmatprep.subr.mxu0 0.0
    %94 = vmatpush1.msra.mxu0 0.0
    %95 = vmatprep.subr.mxu0 0.0
    %96 = vmatpush1.msra.mxu0 0.0
    %97 = vmatprep.subr.mxu0 0.0
    %98 = vmatpush1.msra.mxu0 %v38
    %99 = vmatprep.subr.mxu0 0.0
    %100 = vmatpush2.msra.mxu0 0.0
    %101 = vmatprep.subr.mxu0 0.0
    %102 = vmatpush2.msra.mxu0 0.0
    %103 = vmatprep.subr.mxu0 0.0
    %104 = vmatpush2.msra.mxu0 0.0
    %105 = vmatprep.subr.mxu0 0.0
    %106 = vmatpush2.msra.mxu0 0.0
    %107 = vmatprep.subr.mxu0 0.0
    %108 = vmatpush2.msra.mxu0 0.0
    %109 = vmatprep.subr.mxu0 0.0
    %110 = vmatpush2.msra.mxu0 0.0
    %111 = vmatprep.subr.mxu0 0.0
    %112 = vmatpush2.msra.mxu0 0.0
    %113 = vmatprep.subr.mxu0 0.0
    %114 = vmatpush2.msra.mxu0 0.0
    %115 = vmatprep.subr.mxu0 0.0
    %116 = vmatpush2.msra.mxu0 0.0
    %117 = vmatprep.subr.mxu0 0.0
    %118 = vmatpush2.msra.mxu0 0.0
    %119 = vmatprep.subr.mxu0 0.0
    %120 = vmatpush2.msra.mxu0 0.0
    %121 = vmatprep.subr.mxu0 0.0
    %122 = vmatpush2.msra.mxu0 0.0
    %123 = vmatprep.subr.mxu0 0.0
    %124 = vmatpush2.msra.mxu0 0.0
    %125 = vmatprep.subr.mxu0 0.0
    %126 = vmatpush2.msra.mxu0 0.0
    %127 = vmatprep.subr.mxu0 0.0
    %128 = vmatpush2.msra.mxu0 0.0
    %129 = vmatprep.subr.mxu0 0.0
    %130 = vmatpush2.msra.mxu0 0.0
    %131 = vmatprep.mubr.f32.mxu0 0.0
    %132 = vmatmul.mubr.f32.gmra.mxu0 %v65
    %v133 = vpop.f32.mrf.mxu0
    %v134 = vadd.f32 %v62, %v133
    %v135 = vpop.f32.mrf.mxu0
    %136 = vdwg.mxu0
    %v137 = vmax.f32 %v134, 0.0
    %v138 = vlaneseq
    %v139 = vshrl.u32 %v138, 7
    %v140 = vsub.s32 0, %v139
    %v141 = vrot.slane %v56, %v140
    %142 = vmatprep.subr.mxu0 0.0
    %143 = vmatpush1.msra.mxu0 %v54
    %144 = vmatprep.subr.mxu0 0.0
    %145 = vmatpush1.msra.mxu0 %v53
    %146 = vmatprep.subr.mxu0 0.0
    %147 = vmatpush1.msra.mxu0 %v52
    %148 = vmatprep.subr.mxu0 0.0
    %149 = vmatpush1.msra.mxu0 %v51
    %150 = vmatprep.subr.mxu0 0.0
    %151 = vmatpush1.msra.mxu0 %v50
    %152 = vmatprep.subr.mxu0 0.0
    %153 = vmatpush1.msra.mxu0 %v49
    %154 = vmatprep.subr.mxu0 0.0
    %155 = vmatpush1.msra.mxu0 %v48
    %156 = vmatprep.subr.mxu0 0.0
    %157 = vmatpush1.msra.mxu0 %v47
    %158 = vmatprep.subr.mxu0 0.0
    %159 = vmatpush1.msra.mxu0 %v46
    %160 = vmatprep.subr.mxu0 0.0
    %161 = vmatpush1.msra.mxu0 %v45
    %162 = vmatprep.subr.mxu0 0.0
    %163 = vmatpush1.msra.mxu0 %v44
    %164 = vmatprep.subr.mxu0 0.0
    %165 = vmatpush1.msra.mxu0 %v43
    %166 = vmatprep.subr.mxu0 0.0
    %167 = vmatpush1.msra.mxu0 %v42
    %168 = vmatprep.subr.mxu0 0.0
    %169 = vmatpush1.msra.mxu0 %v41
    %170 = vmatprep.subr.mxu0 0.0
    %171 = vmatpush1.msra.mxu0 %v40
    %172 = vmatprep.subr.mxu0 0.0
    %173 = vmatpush1.msra.mxu0 %v39
    %174 = vmatprep.subr.mxu0 0.0
    %175 = vmatpush2.msra.mxu0 0.0
    %176 = vmatprep.subr.mxu0 0.0
    %177 = vmatpush2.msra.mxu0 0.0
    %178 = vmatprep.subr.mxu0 0.0
    %179 = vmatpush2.msra.mxu0 0.0
    %180 = vmatprep.subr.mxu0 0.0
    %181 = vmatpush2.msra.mxu0 0.0
    %182 = vmatprep.subr.mxu0 0.0
    %183 = vmatpush2.msra.mxu0 0.0
    %184 = vmatprep.subr.mxu0 0.0
    %185 = vmatpush2.msra.mxu0 0.0
    %186 = vmatprep.subr.mxu0 0.0
    %187 = vmatpush2.msra.mxu0 0.0
    %188 = vmatprep.subr.mxu0 0.0
    %189 = vmatpush2.msra.mxu0 0.0
    %190 = vmatprep.subr.mxu0 0.0
    %191 = vmatpush2.msra.mxu0 0.0
    %192 = vmatprep.subr.mxu0 0.0
    %193 = vmatpush2.msra.mxu0 0.0
    %194 = vmatprep.subr.mxu0 0.0
    %195 = vmatpush2.msra.mxu0 0.0
    %196 = vmatprep.subr.mxu0 0.0
    %197 = vmatpush2.msra.mxu0 0.0
    %198 = vmatprep.subr.mxu0 0.0
    %199 = vmatpush2.msra.mxu0 0.0
    %200 = vmatprep.subr.mxu0 0.0
    %201 = vmatpush2.msra.mxu0 0.0
    %202 = vmatprep.subr.mxu0 0.0
    %203 = vmatpush2.msra.mxu0 0.0
    %204 = vmatprep.subr.mxu0 0.0
    %205 = vmatpush2.msra.mxu0 0.0
    %206 = vmatprep.mubr.f32.mxu0 0.0
    %207 = vmatmul.mubr.f32.gmra.mxu0 %v137
    %v208 = vpop.f32.mrf.mxu0
    %v209 = vadd.f32 %v141, %v208
    %v210 = vpop.f32.mrf.mxu0
    %211 = vdwg.mxu0
    %v212 = vtanh.pop %v209
    %v213 = vlaneseq
    %v214 = vshrl.u32 %v213, 7
    %v215 = vsub.s32 0, %v214
    %v216 = vrot.slane %v57, %v215
    %v217 = vmul.f32 %v212, %v216
    %218 = vst [vmem:[#allocation7] sm:$0xff] %v217
    // Predicated region
    $region18: #{tpu_custom_call.1} parent=1 // pred_check
      _
    $region19: #{tpu_custom_call.1} parent=1 // pred_check_branch
      %220 = sbr.rel (0) target = $region21
    $region20: #{tpu_custom_call.1} parent=1 // pred_region
      %s222 = ssub.s32 128, 128
      %223 = vsyncadd [#allocation4], %s222
      %s225 = sshll.u32 [#allocation7], 4
      %s226 = int_to_ptr.vmem [resolvable:$true] %s225
      %228 = dma.vmem_to_hbm [thread:$0]  %s226, 128, %s2, [#allocation4]
    $region21: #{tpu_custom_call.1} parent=1 // pred_fallthru
      _
    // Predicated region
    $region22: #{tpu_custom_call.1} parent=1 // pred_check
      _
    $region23: #{tpu_custom_call.1} parent=1 // pred_check_branch
      %230 = sbr.rel (0) target = $region25
    $region24: #{tpu_custom_call.1} parent=1 // pred_region
      %231 = dma.done [#allocation4], 128
    $region25: #{tpu_custom_call.1} parent=1 // pred_fallthru
      _
    %232 = vsyncpa [#allocation3], 1
    %233 = vsyncpa [#allocation6], 1
    %234 = vsyncpa [#allocation4], 1

</llo_original>
